<compile_context>
chip_gen: v5e
topology: v5e:2x2
jax: 0.10.0
libtpu: 0.0.40
codegen_flags: <defaults>
</compile_context>

<pallas_src>
import math
import functools

import jax
import jax.numpy as jnp
from jax import lax
from jax.experimental import pallas as pl
from jax.experimental.pallas import tpu as pltpu


def _default_vmem_limit():
    # ~half of physical VMEM, capped at 100 MiB: ~64 MiB on v5e/v6e (128 MiB parts),
    # 32 MiB on v7x (64 MiB physical). Falls back to 32 MiB if the query fails.
    try:
        cap = pltpu.get_tpu_info().vmem_capacity_bytes
    except Exception:
        cap = 64 * 1024 * 1024
    return int(min(cap // 2, 100 * 1024 * 1024))


_VMEM_LIMIT = _default_vmem_limit()


def _pick_tile(dim, preferred, align):
    """Largest tile <= preferred that is a multiple of `align` and divides `dim`
    (falls back to the full dim, which is always a legal block)."""
    if dim <= preferred:
        return dim
    t = (preferred // align) * align
    while t >= align:
        if dim % t == 0:
            return t
        t -= align
    return dim


# ----------------------------- down-projection ------------------------------ #

def _matmul_kernel(x_ref, w_ref, o_ref, acc_ref):
    # x: (tm, tk), w: (tk, tn), o: (tm, tn); K is grid axis 2 (reduction).
    @pl.when(pl.program_id(2) == 0)
    def _():
        acc_ref[...] = jnp.zeros_like(acc_ref)

    acc_ref[...] += jnp.dot(x_ref[...], w_ref[...],
                            preferred_element_type=jnp.float32)

    @pl.when(pl.program_id(2) == pl.num_programs(2) - 1)
    def _():
        o_ref[...] = acc_ref[...].astype(o_ref.dtype)


def _matmul(x, w, *, tm=512, tn=512, tk=1024):
    """Tiled y = x @ w with f32 accumulation (bf16 in/out). Used for the fused
    q/kv down-projection."""
    M, K = x.shape
    K2, N = w.shape
    assert K == K2
    tm = _pick_tile(M, tm, 8)
    tn = _pick_tile(N, tn, 128)
    tk = _pick_tile(K, tk, 128)
    grid = (M // tm, N // tn, K // tk)
    return pl.pallas_call(
        _matmul_kernel,
        out_shape=jax.ShapeDtypeStruct((M, N), x.dtype),
        grid_spec=pltpu.PrefetchScalarGridSpec(
            num_scalar_prefetch=0,
            grid=grid,
            in_specs=[pl.BlockSpec((tm, tk), lambda i, j, k: (i, k)),
                      pl.BlockSpec((tk, tn), lambda i, j, k: (k, j))],
            out_specs=pl.BlockSpec((tm, tn), lambda i, j, k: (i, j)),
            scratch_shapes=[pltpu.VMEM((tm, tn), jnp.float32)]),
        compiler_params=pltpu.CompilerParams(
            dimension_semantics=("parallel", "parallel", "arbitrary"),
            vmem_limit_bytes=_VMEM_LIMIT),
    )(x, w)


# --------------- fused up-proj + RoPE + attention + o_proj ------------------ #

def _fused_attn_kernel(down_ref, wq_ref, wk_ref, wv_ref, wo_ref, cos_ref, sin_ref,
                       o_ref, acc_ref, *, scale, latent_pad, num_groups):
    """Grid = (batch, kv_head); kv_head is the reduction axis of the output proj.

    down_ref : (1, S, 2*Lp) bf16   latent activations for batch b ([:Lp]=q, [Lp:]=kv)
    wq_ref   : (1, g, Lp, D) bf16  q up-proj weights of this GQA group
    wk_ref   : (1, Lp, D)   bf16   k up-proj weight of this kv head
    wv_ref   : (1, Lp, D)   bf16   v up-proj weight of this kv head
    wo_ref   : (1, g*D, H)  bf16   o-proj rows of this GQA group
    cos/sin  : (S, D)       f32    rotary tables (sin pre-signed: [-s, s])
    o_ref    : (1, S, H)           final attention output for batch b
    acc_ref  : (S, H)       f32    o-proj accumulator (persists across kv heads)
    """
    kh = pl.program_id(1)

    @pl.when(kh == 0)
    def _():
        acc_ref[...] = jnp.zeros_like(acc_ref)

    S, D = cos_ref.shape
    half = D // 2
    Lp = latent_pad
    g = num_groups
    bf16 = jnp.bfloat16

    cos = cos_ref[...]                       # (S, D) f32
    sin = sin_ref[...]                       # (S, D) f32, pre-signed (-s, +s)

    def rope(x):
        # rotate_half with the +/- sign folded into the sin table.
        rot = jnp.concatenate([x[:, half:], x[:, :half]], axis=-1)
        return x * cos + rot * sin

    down = down_ref[0]                       # (S, 2*Lp) bf16
    down_q = down[:, :Lp]                    # (S, Lp)
    down_kv = down[:, Lp:]                   # (S, Lp)

    # shared K / V of this kv head (f32 accumulation, bf16 MXU inputs)
    k = jnp.dot(down_kv, wk_ref[0], preferred_element_type=jnp.float32)  # (S, D)
    v = jnp.dot(down_kv, wv_ref[0], preferred_element_type=jnp.float32)  # (S, D)
    k = rope(k).astype(bf16)
    v = v.astype(bf16)

    # causal mask (no modulo): query row i attends to keys j <= i
    row = lax.broadcasted_iota(jnp.int32, (S, S), 0)
    col = lax.broadcasted_iota(jnp.int32, (S, S), 1)
    causal = col <= row

    outs = []
    for i in range(g):                       # static unroll over the GQA group
        q = jnp.dot(down_q, wq_ref[0, i], preferred_element_type=jnp.float32)
        q = (rope(q) * scale).astype(bf16)   # fold 1/sqrt(D) into Q
        # QK^T without materializing k.T (contract last dims), bf16 MXU / f32 acc
        s = lax.dot_general(q, k, (((1,), (1,)), ((), ())),
                            preferred_element_type=jnp.float32)          # (S, S)
        s = jnp.where(causal, s, -jnp.inf)
        m = jnp.max(s, axis=-1, keepdims=True)
        e = jnp.exp(s - m)
        den = jnp.sum(e, axis=-1, keepdims=True)
        o = jnp.dot(e.astype(bf16), v, preferred_element_type=jnp.float32)  # (S, D)
        o = o / den
        outs.append(o.astype(bf16))

    # pack the group lane-dense (S, g*D) and accumulate the output projection
    o_cat = jnp.concatenate(outs, axis=-1)                                # (S, g*D)
    acc_ref[...] += jnp.dot(o_cat, wo_ref[0], preferred_element_type=jnp.float32)

    @pl.when(kh == pl.num_programs(1) - 1)
    def _():
        o_ref[0] = acc_ref[...].astype(o_ref.dtype)


def _fused_mla_attention(down3d, wq_grp, wk_heads, wv_heads, wo_grp,
                         cos, sin_signed, out_dtype):
    """down3d: (B, S, 2*Lp) bf16; weights head/group-major bf16; returns (B, S, H)."""
    B, S, two_lp = down3d.shape
    nKV, g, Lp, D = wq_grp.shape
    H = wo_grp.shape[2]
    assert two_lp == 2 * Lp
    kernel = functools.partial(_fused_attn_kernel, scale=1.0 / math.sqrt(D),
                               latent_pad=Lp, num_groups=g)
    return pl.pallas_call(
        kernel,
        out_shape=jax.ShapeDtypeStruct((B, S, H), out_dtype),
        grid_spec=pltpu.PrefetchScalarGridSpec(
            num_scalar_prefetch=0,
            grid=(B, nKV),
            in_specs=[
                pl.BlockSpec((1, S, 2 * Lp), lambda b, kh: (b, 0, 0)),      # latents
                pl.BlockSpec((1, g, Lp, D), lambda b, kh: (kh, 0, 0, 0)),   # Wq group
                pl.BlockSpec((1, Lp, D), lambda b, kh: (kh, 0, 0)),         # Wk head
                pl.BlockSpec((1, Lp, D), lambda b, kh: (kh, 0, 0)),         # Wv head
                pl.BlockSpec((1, g * D, H), lambda b, kh: (kh, 0, 0)),      # Wo group
                pl.BlockSpec((S, D), lambda b, kh: (0, 0)),                 # cos
                pl.BlockSpec((S, D), lambda b, kh: (0, 0)),                 # sin signed
            ],
            out_specs=pl.BlockSpec((1, S, H), lambda b, kh: (b, 0, 0)),
            scratch_shapes=[pltpu.VMEM((S, H), jnp.float32)]),
        compiler_params=pltpu.CompilerParams(
            dimension_semantics=("parallel", "arbitrary"),
            vmem_limit_bytes=_VMEM_LIMIT),
    )(down3d, wq_grp, wk_heads, wv_heads, wo_grp, cos, sin_signed)


# --------------------------- rotary tables ---------------------------------- #

def rotary_tables(seq_len, dim, base=10000.0, dtype=jnp.float32):
    inv_freq = 1.0 / (base ** (jnp.arange(0, dim, 2, dtype=jnp.float32) / dim))
    t = jnp.arange(seq_len, dtype=jnp.float32)
    freqs = jnp.einsum("i,j->ij", t, inv_freq)
    emb = jnp.concatenate([freqs, freqs], axis=-1)
    return jnp.cos(emb).astype(dtype), jnp.sin(emb).astype(dtype)


# --------------------------- module wrapper -------------------------------- #

class MLAParams:
    """Raw f32 weights stored as (in_features, out_features) == W.T of nn.Linear,
    plus kernel-friendly fused / padded / head-major bf16 layouts built once."""

    def __init__(self, key, hidden_size, num_heads, num_kv_heads,
                 compression_ratio, initializer_range,
                 max_position_embeddings=2048, dtype=jnp.float32):
        self.hidden_size = hidden_size
        self.num_heads = num_heads
        self.num_kv_heads = num_kv_heads
        self.head_dim = hidden_size // num_heads
        self.latent_dim = hidden_size // compression_ratio
        self.latent_pad = ((self.latent_dim + 127) // 128) * 128   # 72 -> 128
        self.num_key_value_groups = num_heads // num_kv_heads

        H, L, Lp, D = hidden_size, self.latent_dim, self.latent_pad, self.head_dim
        nH, nKV = num_heads, num_kv_heads
        g = self.num_key_value_groups
        bf16 = jnp.bfloat16

        ks = jax.random.split(key, 6)
        init = lambda k, shape: (initializer_range *
                                 jax.random.normal(k, shape, dtype=dtype))
        # raw weights (used by the pure-JAX reference)
        self.w_q_d = init(ks[0], (H, L))
        self.w_kv_d = init(ks[1], (H, L))
        self.w_q_u = init(ks[2], (L, nH * D))
        self.w_k_u = init(ks[3], (L, nKV * D))
        self.w_v_u = init(ks[4], (L, nKV * D))
        self.w_o = init(ks[5], (nH * D, H))

        # --- kernel layouts (one-time preprocessing, outside the hot path) ---
        pad_cols = lambda w: jnp.pad(w, ((0, 0), (0, Lp - L)))
        pad_rows = lambda w: jnp.pad(w, ((0, Lp - L), (0, 0)))

        # fused down-projection: columns [0,Lp) = q latent, [Lp,2Lp) = kv latent
        self.w_down_fused = jnp.concatenate(
            [pad_cols(self.w_q_d), pad_cols(self.w_kv_d)], axis=1).astype(bf16)

        # q up-proj weights grouped per kv head: (nKV, g, Lp, D)
        self.w_q_u_grp = (pad_rows(self.w_q_u)
                          .reshape(Lp, nH, D).transpose(1, 0, 2)
                          .reshape(nKV, g, Lp, D).astype(bf16))
        # k / v up-proj weights head-major: (nKV, Lp, D)
        self.w_k_u_heads = (pad_rows(self.w_k_u)
                            .reshape(Lp, nKV, D).transpose(1, 0, 2).astype(bf16))
        self.w_v_u_heads = (pad_rows(self.w_v_u)
                            .reshape(Lp, nKV, D).transpose(1, 0, 2).astype(bf16))
        # o-proj rows grouped per kv head: (nKV, g*D, H)
        self.w_o_grp = self.w_o.reshape(nKV, g * D, H).astype(bf16)

        # rotary tables precomputed once (forward only slices them)
        cos, sin = rotary_tables(max_position_embeddings, D, dtype=jnp.float32)
        self.cos_cached = cos
        self.sin_cached = sin
        half = D // 2
        self.sin_signed_cached = jnp.concatenate(
            [-sin[:, :half], sin[:, half:]], axis=-1)


def mla_forward(params: MLAParams, hidden_states):
    """Equivalent of SmolLM2MultiHeadLatentAttention.forward with
    attention_mask=None, past_key_value=None, use_cache=False (causal SDPA path).
    Returns attn_output of shape (B, S, hidden)."""
    B, S, H = hidden_states.shape
    Lp = params.latent_pad
    M = B * S

    x2d = hidden_states.reshape(M, H).astype(jnp.bfloat16)

    # fused q/kv down-projection (one tiled matmul, bf16 storage, f32 accum)
    down = _matmul(x2d, params.w_down_fused)                 # (M, 2*Lp) bf16
    down3d = down.reshape(B, S, 2 * Lp)                      # free reshape

    cos = params.cos_cached[:S]
    sin_signed = params.sin_signed_cached[:S]

    # fused up-proj + RoPE + causal GQA attention + o_proj (single pallas_call)
    out = _fused_mla_attention(down3d, params.w_q_u_grp, params.w_k_u_heads,
                               params.w_v_u_heads, params.w_o_grp,
                               cos, sin_signed, hidden_states.dtype)
    return out                                               # (B, S, H)


# ----------------------------- pure-JAX reference --------------------------- #

def mla_reference(params: MLAParams, hidden_states):
    """Standard (transpose/repeat_kv) formulation, mirroring the kernel's bf16
    quantization points so the numeric check stays tight."""
    B, S, H = hidden_states.shape
    nH, nKV, D = params.num_heads, params.num_kv_heads, params.head_dim
    g = params.num_key_value_groups
    f32, bf16 = jnp.float32, jnp.bfloat16
    M = B * S

    x2d = hidden_states.reshape(M, H).astype(bf16)
    q_d = jnp.dot(x2d, params.w_q_d.astype(bf16),
                  preferred_element_type=f32).astype(bf16)
    kv_d = jnp.dot(x2d, params.w_kv_d.astype(bf16),
                   preferred_element_type=f32).astype(bf16)

    q = jnp.dot(q_d, params.w_q_u.astype(bf16), preferred_element_type=f32)
    k = jnp.dot(kv_d, params.w_k_u.astype(bf16), preferred_element_type=f32)
    v = jnp.dot(kv_d, params.w_v_u.astype(bf16), preferred_element_type=f32)
    q = q.reshape(B, S, nH, D).transpose(0, 2, 1, 3)
    k = k.reshape(B, S, nKV, D).transpose(0, 2, 1, 3)
    v = v.reshape(B, S, nKV, D).transpose(0, 2, 1, 3)

    cos = params.cos_cached[:S]
    sin = params.sin_cached[:S]

    def rope(x):
        x1, x2 = x[..., : D // 2], x[..., D // 2:]
        rot = jnp.concatenate([-x2, x1], axis=-1)
        return x * cos + rot * sin

    q = (rope(q) * (1.0 / math.sqrt(D))).astype(bf16)
    k = rope(k).astype(bf16)
    v = v.astype(bf16)
    k = jnp.repeat(k, g, axis=1)
    v = jnp.repeat(v, g, axis=1)

    s = jnp.einsum("bhqd,bhkd->bhqk", q, k, preferred_element_type=f32)
    mask = jnp.tril(jnp.ones((S, S), dtype=bool))
    s = jnp.where(mask, s, -jnp.inf)
    m = jnp.max(s, axis=-1, keepdims=True)
    e = jnp.exp(s - m)
    den = jnp.sum(e, axis=-1, keepdims=True)
    o = jnp.einsum("bhqk,bhkd->bhqd", e.astype(bf16), v,
                   preferred_element_type=f32) / den
    o = o.transpose(0, 2, 1, 3).reshape(M, nH * D).astype(bf16)
    out = jnp.dot(o, params.w_o.astype(bf16), preferred_element_type=f32)
    return out.reshape(B, S, H).astype(hidden_states.dtype)


# --------------------------------- main ------------------------------------ #

if __name__ == "__main__":
    # SmolLM2Config defaults: hidden=576, heads=9 (head_dim=64), kv_heads=3,
    # compression_ratio=8 (latent=72). Small batch/seq for the demo.
    hidden_size = 576
    num_heads = 9
    num_kv_heads = 3
    compression_ratio = 8
    initializer_range = 0.041666666666666664
    B, S = 2, 8

    key = jax.random.PRNGKey(0)
    k_params, k_x = jax.random.split(key)
    params = MLAParams(k_params, hidden_size, num_heads, num_kv_heads,
                       compression_ratio, initializer_range,
                       max_position_embeddings=2048)
    hidden_states = jax.random.normal(k_x, (B, S, hidden_size), dtype=jnp.float32)

    out = jax.block_until_ready(mla_forward(params, hidden_states))
    ref = jax.block_until_ready(mla_reference(params, hidden_states))

    assert out.shape == (B, S, hidden_size)
    assert jnp.allclose(out, ref, atol=2e-3, rtol=2e-3), "mismatch vs JAX reference"

    print("KERNEL_OK")
</pallas_src>

<mosaic_0001>
module attributes {stable_mosaic.version = 11 : i64} {
  func.func @_matmul_kernel(%arg0: i32, %arg1: i32, %arg2: i32, %arg3: memref<16x576xbf16, #tpu.memory_space<vmem>>, %arg4: memref<576x256xbf16, #tpu.memory_space<vmem>>, %arg5: memref<16x256xbf16, #tpu.memory_space<vmem>>, %arg6: memref<16x256xf32, #tpu.memory_space<vmem>>) attributes {dimension_semantics = [#tpu.dimension_semantics<parallel>, #tpu.dimension_semantics<parallel>, #tpu.dimension_semantics<arbitrary>], iteration_bounds = array<i64: 1, 1, 1>, scalar_prefetch = 0 : i64, scratch_operands = 1 : i64, tpu.core_type = #tpu.core_type<tc>, window_params = [{transform_indices = @transform_0, window_bounds = array<i64: 16, 576>}, {transform_indices = @transform_1, window_bounds = array<i64: 576, 256>}, {transform_indices = @transform_2, window_bounds = array<i64: 16, 256>}]} {
    %c0_i32 = arith.constant 0 : i32
    %0 = arith.cmpi eq, %arg2, %c0_i32 : i32
    %1 = arith.extui %0 : i1 to i32
    %c0_i32_0 = arith.constant 0 : i32
    %2 = arith.cmpi ne, %1, %c0_i32_0 : i32
    scf.if %2 {
      %cst_10 = arith.constant 0.000000e+00 : f32
      %12 = vector.broadcast %cst_10 : f32 to vector<16x256xf32>
      %c0_11 = arith.constant 0 : index
      %c0_12 = arith.constant 0 : index
      %13 = vector.load %arg6[%c0_11, %c0_12] : memref<16x256xf32, #tpu.memory_space<vmem>>, vector<16x256xf32>
      tpu.vector_store %arg6[%c0_11, %c0_12], %12 {strides = array<i32>} : memref<16x256xf32, #tpu.memory_space<vmem>>, vector<16x256xf32>,
    } else {
    }
    %c0 = arith.constant 0 : index
    %c0_1 = arith.constant 0 : index
    %3 = vector.load %arg6[%c0, %c0_1] : memref<16x256xf32, #tpu.memory_space<vmem>>, vector<16x256xf32>
    %c0_2 = arith.constant 0 : index
    %c0_3 = arith.constant 0 : index
    %4 = vector.load %arg3[%c0_2, %c0_3] : memref<16x576xbf16, #tpu.memory_space<vmem>>, vector<16x576xbf16>
    %c0_4 = arith.constant 0 : index
    %c0_5 = arith.constant 0 : index
    %5 = vector.load %arg4[%c0_4, %c0_5] : memref<576x256xbf16, #tpu.memory_space<vmem>>, vector<576x256xbf16>
    %cst = arith.constant dense<0.000000e+00> : vector<16x256xf32>
    %6 = tpu.matmul %4, %5, %cst {dimension_numbers = #tpu.dot_dimension_numbers<[1], [0], [0], [1], [0, 0, 1, 1], [], []>} : vector<16x576xbf16>, vector<576x256xbf16>, vector<16x256xf32> -> vector<16x256xf32>
    %7 = arith.addf %3, %6 : vector<16x256xf32>
    %c0_6 = arith.constant 0 : index
    %c0_7 = arith.constant 0 : index
    %8 = vector.load %arg6[%c0_6, %c0_7] : memref<16x256xf32, #tpu.memory_space<vmem>>, vector<16x256xf32>
    tpu.vector_store %arg6[%c0_6, %c0_7], %7 {strides = array<i32>} : memref<16x256xf32, #tpu.memory_space<vmem>>, vector<16x256xf32>,
    %c0_i32_8 = arith.constant 0 : i32
    %9 = arith.cmpi eq, %arg2, %c0_i32_8 : i32
    %10 = arith.extui %9 : i1 to i32
    %c0_i32_9 = arith.constant 0 : i32
    %11 = arith.cmpi ne, %10, %c0_i32_9 : i32
    scf.if %11 {
      %c0_10 = arith.constant 0 : index
      %c0_11 = arith.constant 0 : index
      %12 = vector.load %arg6[%c0_10, %c0_11] : memref<16x256xf32, #tpu.memory_space<vmem>>, vector<16x256xf32>
      %13 = arith.truncf %12 : vector<16x256xf32> to vector<16x256xbf16>
      %c0_12 = arith.constant 0 : index
      %c0_13 = arith.constant 0 : index
      %14 = vector.load %arg5[%c0_12, %c0_13] : memref<16x256xbf16, #tpu.memory_space<vmem>>, vector<16x256xbf16>
      tpu.vector_store %arg5[%c0_12, %c0_13], %13 {strides = array<i32>} : memref<16x256xbf16, #tpu.memory_space<vmem>>, vector<16x256xbf16>,
    } else {
    }
    return
  }
  func.func @transform_0(%arg0: i32, %arg1: i32, %arg2: i32) -> (i32, i32) {
    %c0_i32 = arith.constant 0 : i32
    return %arg0, %arg2 : i32, i32
  }
  func.func @transform_1(%arg0: i32, %arg1: i32, %arg2: i32) -> (i32, i32) {
    %c0_i32 = arith.constant 0 : i32
    return %arg2, %arg1 : i32, i32
  }
  func.func @transform_2(%arg0: i32, %arg1: i32, %arg2: i32) -> (i32, i32) {
    %c0_i32 = arith.constant 0 : i32
    return %arg0, %arg1 : i32, i32
  }
}

</mosaic_0001>

<llo_original>
// kernel: tpu_custom_call.1
$region0: #{tpu_custom_call.1}
  #allocation0 [shape = 'u32[]', space=smem, size = 0x4, offset = 0x4, fixed_abs, tag = 'smem constant byte address 0x4 - core index']
  #allocation1 [shape = 'u32[72,128]{1,0:T(1,128)}', space=vmem, size = 0x9000, scoped, tag = 'internal scratch']
  #allocation2 [shape = 'f32[16,256]{1,0:T(8,128)}', space=vmem, size = 0x4000, scoped, tag = 'scratch operand']
  %s0 = inlined_call_operand.hbm [shape: bf16[16,576], index: 0, kind: input, shape index: {}]
  %s1 = inlined_call_operand.hbm [shape: bf16[576,256], index: 1, kind: input, shape index: {}]
  %s2 = inlined_call_operand.hbm [shape: bf16[16,256], index: 2, kind: output, shape index: {}]
  %s3 = sld [smem:[#allocation0]]
  $region34: #{tpu_custom_call.1} parent=0
    _
  %s5 = ssub.s32 1, %s3
  %s6 = scalar_select 0, %s5, %s3
  $region1: #{tpu_custom_call.1} parent=0
    #allocation3 [shape = 'u8[20480]{0}', space=vmem, size = 0x5000, scoped, tag = 'input window, operand 0, single buffered']
    #allocation4 [shape = 's32[1]{0}', space=sflag, size = 0x4, scoped, tag = 'scoped memory for tpu_custom_call.1']
    #allocation5 [shape = 's32[1]{0}', space=sflag, size = 0x4, scoped, tag = 'scoped memory for tpu_custom_call.1']
    #allocation6 [shape = 'u8[294912]{0}', space=vmem, size = 0x48000, scoped, tag = 'input window, operand 1, single buffered']
    #allocation7 [shape = 's32[1]{0}', space=sflag, size = 0x4, scoped, tag = 'scoped memory for tpu_custom_call.1']
    #allocation8 [shape = 'u8[8192]{0}', space=vmem, size = 0x2000, scoped, tag = 'output window, operand 0, single buffered']
    %7 = vsyncpa [#allocation4], 0
    %8 = vsyncpa [#allocation7], 0
    %9 = vsyncpa [#allocation5], 0
    // Predicated region
    $region2: #{tpu_custom_call.1} parent=1 // pred_check
      _
    $region3: #{tpu_custom_call.1} parent=1 // pred_check_branch
      %11 = sbr.rel (0) target = $region5
    $region4: #{tpu_custom_call.1} parent=1 // pred_region
      %13 = vsyncadd [#allocation4], 0
      %s14 = sshll.u32 %s0, 4
      %s15 = int_to_ptr.hbm [resolvable:$true] %s14
      %s16 = sshll.u32 [#allocation3], 4
      %s17 = int_to_ptr.vmem [resolvable:$true] %s16
      %22 = dma.hbm_to_vmem [thread:$0]  %s15, 640, %s17, [#allocation4], 320, 320, 20
    $region5: #{tpu_custom_call.1} parent=1 // pred_fallthru
      _
    // Predicated region
    $region6: #{tpu_custom_call.1} parent=1 // pred_check
      _
    $region7: #{tpu_custom_call.1} parent=1 // pred_check_branch
      %24 = sbr.rel (0) target = $region9
    $region8: #{tpu_custom_call.1} parent=1 // pred_region
      %26 = vsyncadd [#allocation7], 0
      %s27 = sshll.u32 %s1, 4
      %s28 = int_to_ptr.hbm [resolvable:$true] %s27
      %s29 = sshll.u32 [#allocation6], 4
      %s30 = int_to_ptr.vmem [resolvable:$true] %s29
      %35 = dma.hbm_to_vmem [thread:$0]  %s28, 9216, %s30, [#allocation7], 128, 128, 8
    $region9: #{tpu_custom_call.1} parent=1 // pred_fallthru
      _
    // Predicated region
    $region10: #{tpu_custom_call.1} parent=1 // pred_check
      _
    $region11: #{tpu_custom_call.1} parent=1 // pred_check_branch
      %37 = sbr.rel (0) target = $region13
    $region12: #{tpu_custom_call.1} parent=1 // pred_region
      %39 = dma.done [#allocation4], 640
    $region13: #{tpu_custom_call.1} parent=1 // pred_fallthru
      _
    // Predicated region
    $region14: #{tpu_custom_call.1} parent=1 // pred_check
      _
    $region15: #{tpu_custom_call.1} parent=1 // pred_check_branch
      %41 = sbr.rel (0) target = $region17
    $region16: #{tpu_custom_call.1} parent=1 // pred_region
      %43 = dma.done [#allocation7], 9216
    $region17: #{tpu_custom_call.1} parent=1 // pred_fallthru
      _
    %p45 = scmp.eq.s32.totalorder 0, 0
    // Predicated region
    $region18: #{tpu_custom_call.1} parent=1 // pred_check
      %p46 = pneg %p45
    $region19: #{tpu_custom_call.1} parent=1 // pred_check_branch
      %48 = sbr.rel (%p46) target = $region21
    $region20: #{tpu_custom_call.1} parent=1 // pred_region
      %49 = vst [vmem:[#allocation2] sm:$0xff] 0.0
      %50 = vst [vmem:[#allocation2 + $0x8] sm:$0xff] 0.0
      %51 = vst [vmem:[#allocation2 + $0x10] sm:$0xff] 0.0
      %52 = vst [vmem:[#allocation2 + $0x18] sm:$0xff] 0.0
    $region21: #{tpu_custom_call.1} parent=1 // pred_fallthru
      _
    %v53 = vld [vmem:[#allocation2] sm:$0xff]
    %v54 = vld [vmem:[#allocation2 + $0x8] sm:$0xff]
    %v55 = vld [vmem:[#allocation2 + $0x10] sm:$0xff]
    %v56 = vld [vmem:[#allocation2 + $0x18] sm:$0xff]
    %v57 = vld [vmem:[#allocation3] sm:$0xff]
    %v58 = vld [vmem:[#allocation3 + $0x8] sm:$0xff]
    %v59 = vld [vmem:[#allocation3 + $0x10] sm:$0xf]
    %v60 = vld [vmem:[#allocation3 + $0x14] sm:$0xff]
    %v61 = vld [vmem:[#allocation3 + $0x1c] sm:$0xff]
    %v62 = vld [vmem:[#allocation3 + $0x24] sm:$0xf]
    %v63 = vld [vmem:[#allocation6] sm:$0xff]
    %v64 = vld [vmem:[#allocation6 + $0x8] sm:$0xff]
    %v65 = vld [vmem:[#allocation6 + $0x10] sm:$0xff]
    %v66 = vld [vmem:[#allocation6 + $0x18] sm:$0xff]
    %v67 = vld [vmem:[#allocation6 + $0x20] sm:$0xff]
    %v68 = vld [vmem:[#allocation6 + $0x28] sm:$0xff]
    %v69 = vld [vmem:[#allocation6 + $0x30] sm:$0xff]
    %v70 = vld [vmem:[#allocation6 + $0x38] sm:$0xff]
    %v71 = vld [vmem:[#allocation6 + $0x40] sm:$0xff]
    %v72 = vld [vmem:[#allocation6 + $0x48] sm:$0xff]
    %v73 = vld [vmem:[#allocation6 + $0x50] sm:$0xff]
    %v74 = vld [vmem:[#allocation6 + $0x58] sm:$0xff]
    %v75 = vld [vmem:[#allocation6 + $0x60] sm:$0xff]
    %v76 = vld [vmem:[#allocation6 + $0x68] sm:$0xff]
    %v77 = vld [vmem:[#allocation6 + $0x70] sm:$0xff]
    %v78 = vld [vmem:[#allocation6 + $0x78] sm:$0xff]
    %v79 = vld [vmem:[#allocation6 + $0x80] sm:$0xff]
    %v80 = vld [vmem:[#allocation6 + $0x88] sm:$0xff]
    %v81 = vld [vmem:[#allocation6 + $0x90] sm:$0xff]
    %v82 = vld [vmem:[#allocation6 + $0x98] sm:$0xff]
    %v83 = vld [vmem:[#allocation6 + $0xa0] sm:$0xff]
    %v84 = vld [vmem:[#allocation6 + $0xa8] sm:$0xff]
    %v85 = vld [vmem:[#allocation6 + $0xb0] sm:$0xff]
    %v86 = vld [vmem:[#allocation6 + $0xb8] sm:$0xff]
    %v87 = vld [vmem:[#allocation6 + $0xc0] sm:$0xff]
    %v88 = vld [vmem:[#allocation6 + $0xc8] sm:$0xff]
    %v89 = vld [vmem:[#allocation6 + $0xd0] sm:$0xff]
    %v90 = vld [vmem:[#allocation6 + $0xd8] sm:$0xff]
    %v91 = vld [vmem:[#allocation6 + $0xe0] sm:$0xff]
    %v92 = vld [vmem:[#allocation6 + $0xe8] sm:$0xff]
    %v93 = vld [vmem:[#allocation6 + $0xf0] sm:$0xff]
    %v94 = vld [vmem:[#allocation6 + $0xf8] sm:$0xff]
    %v95 = vld [vmem:[#allocation6 + $0x100] sm:$0xff]
    %v96 = vld [vmem:[#allocation6 + $0x108] sm:$0xff]
    %v97 = vld [vmem:[#allocation6 + $0x110] sm:$0xff]
    %v98 = vld [vmem:[#allocation6 + $0x118] sm:$0xff]
    %v99 = vld [vmem:[#allocation6 + $0x120] sm:$0xff]
    %v100 = vld [vmem:[#allocation6 + $0x128] sm:$0xff]
    %v101 = vld [vmem:[#allocation6 + $0x130] sm:$0xff]
    %v102 = vld [vmem:[#allocation6 + $0x138] sm:$0xff]
    %v103 = vld [vmem:[#allocation6 + $0x140] sm:$0xff]
    %v104 = vld [vmem:[#allocation6 + $0x148] sm:$0xff]
    %v105 = vld [vmem:[#allocation6 + $0x150] sm:$0xff]
    %v106 = vld [vmem:[#allocation6 + $0x158] sm:$0xff]
    %v107 = vld [vmem:[#allocation6 + $0x160] sm:$0xff]
    %v108 = vld [vmem:[#allocation6 + $0x168] sm:$0xff]
    %v109 = vld [vmem:[#allocation6 + $0x170] sm:$0xff]
    %v110 = vld [vmem:[#allocation6 + $0x178] sm:$0xff]
    %v111 = vld [vmem:[#allocation6 + $0x180] sm:$0xff]
    %v112 = vld [vmem:[#allocation6 + $0x188] sm:$0xff]
    %v113 = vld [vmem:[#allocation6 + $0x190] sm:$0xff]
    %v114 = vld [vmem:[#allocation6 + $0x198] sm:$0xff]
    %v115 = vld [vmem:[#allocation6 + $0x1a0] sm:$0xff]
    %v116 = vld [vmem:[#allocation6 + $0x1a8] sm:$0xff]
    %v117 = vld [vmem:[#allocation6 + $0x1b0] sm:$0xff]
    %v118 = vld [vmem:[#allocation6 + $0x1b8] sm:$0xff]
    %v119 = vld [vmem:[#allocation6 + $0x1c0] sm:$0xff]
    %v120 = vld [vmem:[#allocation6 + $0x1c8] sm:$0xff]
    %v121 = vld [vmem:[#allocation6 + $0x1d0] sm:$0xff]
    %v122 = vld [vmem:[#allocation6 + $0x1d8] sm:$0xff]
    %v123 = vld [vmem:[#allocation6 + $0x1e0] sm:$0xff]
    %v124 = vld [vmem:[#allocation6 + $0x1e8] sm:$0xff]
    %v125 = vld [vmem:[#allocation6 + $0x1f0] sm:$0xff]
    %v126 = vld [vmem:[#allocation6 + $0x1f8] sm:$0xff]
    %v127 = vld [vmem:[#allocation6 + $0x200] sm:$0xff]
    %v128 = vld [vmem:[#allocation6 + $0x208] sm:$0xff]
    %v129 = vld [vmem:[#allocation6 + $0x210] sm:$0xff]
    %v130 = vld [vmem:[#allocation6 + $0x218] sm:$0xff]
    %v131 = vld [vmem:[#allocation6 + $0x220] sm:$0xff]
    %v132 = vld [vmem:[#allocation6 + $0x228] sm:$0xff]
    %v133 = vld [vmem:[#allocation6 + $0x230] sm:$0xff]
    %v134 = vld [vmem:[#allocation6 + $0x238] sm:$0xff]
    %v141 = vunpack.c.l.b16 %v57
    %v142 = vunpack.c.h.b16 %v57
    %v143 = vunpack.c.l.b16 %v58
    %v144 = vunpack.c.h.b16 %v58
    %v145 = vunpack.c.l.b16 %v59
    %v146 = vunpack.c.l.b16 %v60
    %v147 = vunpack.c.h.b16 %v60
    %v148 = vunpack.c.l.b16 %v61
    %v149 = vunpack.c.h.b16 %v61
    %v150 = vunpack.c.l.b16 %v62
    %v151 = vpack.c.b16 %v146, %v141
    %v152 = vpack.c.b16 %v147, %v142
    %v153 = vpack.c.b16 %v148, %v143
    %v154 = vpack.c.b16 %v149, %v144
    %v155 = vpack.c.b16 %v150, %v145
    %v232 = vunpack.c.l.b16 %v63
    %v233 = vunpack.c.h.b16 %v63
    %v234 = vunpack.c.l.b16 %v64
    %v235 = vunpack.c.h.b16 %v64
    %v236 = vunpack.c.l.b16 %v65
    %v237 = vunpack.c.h.b16 %v65
    %v238 = vunpack.c.l.b16 %v66
    %v239 = vunpack.c.h.b16 %v66
    %v240 = vunpack.c.l.b16 %v67
    %v241 = vunpack.c.h.b16 %v67
    %v242 = vunpack.c.l.b16 %v68
    %v243 = vunpack.c.h.b16 %v68
    %v244 = vunpack.c.l.b16 %v69
    %v245 = vunpack.c.h.b16 %v69
    %v246 = vunpack.c.l.b16 %v70
    %v247 = vunpack.c.h.b16 %v70
    %v248 = vunpack.c.l.b16 %v71
    %v249 = vunpack.c.h.b16 %v71
    %v250 = vunpack.c.l.b16 %v72
    %v251 = vunpack.c.h.b16 %v72
    %v252 = vunpack.c.l.b16 %v73
    %v253 = vunpack.c.h.b16 %v73
    %v254 = vunpack.c.l.b16 %v74
    %v255 = vunpack.c.h.b16 %v74
    %v256 = vunpack.c.l.b16 %v75
    %v257 = vunpack.c.h.b16 %v75
    %v258 = vunpack.c.l.b16 %v76
    %v259 = vunpack.c.h.b16 %v76
    %v260 = vunpack.c.l.b16 %v77
    %v261 = vunpack.c.h.b16 %v77
    %v262 = vunpack.c.l.b16 %v78
    %v263 = vunpack.c.h.b16 %v78
    %v264 = vunpack.c.l.b16 %v79
    %v265 = vunpack.c.h.b16 %v79
    %v266 = vunpack.c.l.b16 %v80
    %v267 = vunpack.c.h.b16 %v80
    %v268 = vunpack.c.l.b16 %v81
    %v269 = vunpack.c.h.b16 %v81
    %v270 = vunpack.c.l.b16 %v82
    %v271 = vunpack.c.h.b16 %v82
    %v272 = vunpack.c.l.b16 %v83
    %v273 = vunpack.c.h.b16 %v83
    %v274 = vunpack.c.l.b16 %v84
    %v275 = vunpack.c.h.b16 %v84
    %v276 = vunpack.c.l.b16 %v85
    %v277 = vunpack.c.h.b16 %v85
    %v278 = vunpack.c.l.b16 %v86
    %v279 = vunpack.c.h.b16 %v86
    %v280 = vunpack.c.l.b16 %v87
    %v281 = vunpack.c.h.b16 %v87
    %v282 = vunpack.c.l.b16 %v88
    %v283 = vunpack.c.h.b16 %v88
    %v284 = vunpack.c.l.b16 %v89
    %v285 = vunpack.c.h.b16 %v89
    %v286 = vunpack.c.l.b16 %v90
    %v287 = vunpack.c.h.b16 %v90
    %v288 = vunpack.c.l.b16 %v91
    %v289 = vunpack.c.h.b16 %v91
    %v290 = vunpack.c.l.b16 %v92
    %v291 = vunpack.c.h.b16 %v92
    %v292 = vunpack.c.l.b16 %v93
    %v293 = vunpack.c.h.b16 %v93
    %v294 = vunpack.c.l.b16 %v94
    %v295 = vunpack.c.h.b16 %v94
    %v296 = vunpack.c.l.b16 %v95
    %v297 = vunpack.c.h.b16 %v95
    %v298 = vunpack.c.l.b16 %v96
    %v299 = vunpack.c.h.b16 %v96
    %v300 = vunpack.c.l.b16 %v97
    %v301 = vunpack.c.h.b16 %v97
    %v302 = vunpack.c.l.b16 %v98
    %v303 = vunpack.c.h.b16 %v98
    %v304 = vunpack.c.l.b16 %v99
    %v305 = vunpack.c.h.b16 %v99
    %v306 = vunpack.c.l.b16 %v100
    %v307 = vunpack.c.h.b16 %v100
    %v308 = vunpack.c.l.b16 %v101
    %v309 = vunpack.c.h.b16 %v101
    %v310 = vunpack.c.l.b16 %v102
    %v311 = vunpack.c.h.b16 %v102
    %v312 = vunpack.c.l.b16 %v103
    %v313 = vunpack.c.h.b16 %v103
    %v314 = vunpack.c.l.b16 %v104
    %v315 = vunpack.c.h.b16 %v104
    %v316 = vunpack.c.l.b16 %v105
    %v317 = vunpack.c.h.b16 %v105
    %v318 = vunpack.c.l.b16 %v106
    %v319 = vunpack.c.h.b16 %v106
    %v320 = vunpack.c.l.b16 %v107
    %v321 = vunpack.c.h.b16 %v107
    %v322 = vunpack.c.l.b16 %v108
    %v323 = vunpack.c.h.b16 %v108
    %v324 = vunpack.c.l.b16 %v109
    %v325 = vunpack.c.h.b16 %v109
    %v326 = vunpack.c.l.b16 %v110
    %v327 = vunpack.c.h.b16 %v110
    %v328 = vunpack.c.l.b16 %v111
    %v329 = vunpack.c.h.b16 %v111
    %v330 = vunpack.c.l.b16 %v112
    %v331 = vunpack.c.h.b16 %v112
    %v332 = vunpack.c.l.b16 %v113
    %v333 = vunpack.c.h.b16 %v113
    %v334 = vunpack.c.l.b16 %v114
    %v335 = vunpack.c.h.b16 %v114
    %v336 = vunpack.c.l.b16 %v115
    %v337 = vunpack.c.h.b16 %v115
    %v338 = vunpack.c.l.b16 %v116
    %v339 = vunpack.c.h.b16 %v116
    %v340 = vunpack.c.l.b16 %v117
    %v341 = vunpack.c.h.b16 %v117
    %v342 = vunpack.c.l.b16 %v118
    %v343 = vunpack.c.h.b16 %v118
    %v344 = vunpack.c.l.b16 %v119
    %v345 = vunpack.c.h.b16 %v119
    %v346 = vunpack.c.l.b16 %v120
    %v347 = vunpack.c.h.b16 %v120
    %v348 = vunpack.c.l.b16 %v121
    %v349 = vunpack.c.h.b16 %v121
    %v350 = vunpack.c.l.b16 %v122
    %v351 = vunpack.c.h.b16 %v122
    %v352 = vunpack.c.l.b16 %v123
    %v353 = vunpack.c.h.b16 %v123
    %v354 = vunpack.c.l.b16 %v124
    %v355 = vunpack.c.h.b16 %v124
    %v356 = vunpack.c.l.b16 %v125
    %v357 = vunpack.c.h.b16 %v125
    %v358 = vunpack.c.l.b16 %v126
    %v359 = vunpack.c.h.b16 %v126
    %v360 = vunpack.c.l.b16 %v127
    %v361 = vunpack.c.h.b16 %v127
    %v362 = vunpack.c.l.b16 %v128
    %v363 = vunpack.c.h.b16 %v128
    %v364 = vunpack.c.l.b16 %v129
    %v365 = vunpack.c.h.b16 %v129
    %v366 = vunpack.c.l.b16 %v130
    %v367 = vunpack.c.h.b16 %v130
    %v368 = vunpack.c.l.b16 %v131
    %v369 = vunpack.c.h.b16 %v131
    %v370 = vunpack.c.l.b16 %v132
    %v371 = vunpack.c.h.b16 %v132
    %v372 = vunpack.c.l.b16 %v133
    %v373 = vunpack.c.h.b16 %v133
    %v374 = vunpack.c.l.b16 %v134
    %v375 = vunpack.c.h.b16 %v134
    %v376 = vpack.c.b16 %v234, %v232
    %v377 = vpack.c.b16 %v235, %v233
    %v378 = vpack.c.b16 %v238, %v236
    %v379 = vpack.c.b16 %v239, %v237
    %v380 = vpack.c.b16 %v242, %v240
    %v381 = vpack.c.b16 %v243, %v241
    %v382 = vpack.c.b16 %v246, %v244
    %v383 = vpack.c.b16 %v247, %v245
    %v384 = vpack.c.b16 %v250, %v248
    %v385 = vpack.c.b16 %v251, %v249
    %v386 = vpack.c.b16 %v254, %v252
    %v387 = vpack.c.b16 %v255, %v253
    %v388 = vpack.c.b16 %v258, %v256
    %v389 = vpack.c.b16 %v259, %v257
    %v390 = vpack.c.b16 %v262, %v260
    %v391 = vpack.c.b16 %v263, %v261
    %v392 = vpack.c.b16 %v266, %v264
    %v393 = vpack.c.b16 %v267, %v265
    %v394 = vpack.c.b16 %v270, %v268
    %v395 = vpack.c.b16 %v271, %v269
    %v396 = vpack.c.b16 %v274, %v272
    %v397 = vpack.c.b16 %v275, %v273
    %v398 = vpack.c.b16 %v278, %v276
    %v399 = vpack.c.b16 %v279, %v277
    %v400 = vpack.c.b16 %v282, %v280
    %v401 = vpack.c.b16 %v283, %v281
    %v402 = vpack.c.b16 %v286, %v284
    %v403 = vpack.c.b16 %v287, %v285
    %v404 = vpack.c.b16 %v290, %v288
    %v405 = vpack.c.b16 %v291, %v289
    %v406 = vpack.c.b16 %v294, %v292
    %v407 = vpack.c.b16 %v295, %v293
    %v408 = vpack.c.b16 %v298, %v296
    %v409 = vpack.c.b16 %v299, %v297
    %v410 = vpack.c.b16 %v302, %v300
    %v411 = vpack.c.b16 %v303, %v301
    %v412 = vpack.c.b16 %v306, %v304
    %v413 = vpack.c.b16 %v307, %v305
    %v414 = vpack.c.b16 %v310, %v308
    %v415 = vpack.c.b16 %v311, %v309
    %v416 = vpack.c.b16 %v314, %v312
    %v417 = vpack.c.b16 %v315, %v313
    %v418 = vpack.c.b16 %v318, %v316
    %v419 = vpack.c.b16 %v319, %v317
    %v420 = vpack.c.b16 %v322, %v320
    %v421 = vpack.c.b16 %v323, %v321
    %v422 = vpack.c.b16 %v326, %v324
    %v423 = vpack.c.b16 %v327, %v325
    %v424 = vpack.c.b16 %v330, %v328
    %v425 = vpack.c.b16 %v331, %v329
    %v426 = vpack.c.b16 %v334, %v332
    %v427 = vpack.c.b16 %v335, %v333
    %v428 = vpack.c.b16 %v338, %v336
    %v429 = vpack.c.b16 %v339, %v337
    %v430 = vpack.c.b16 %v342, %v340
    %v431 = vpack.c.b16 %v343, %v341
    %v432 = vpack.c.b16 %v346, %v344
    %v433 = vpack.c.b16 %v347, %v345
    %v434 = vpack.c.b16 %v350, %v348
    %v435 = vpack.c.b16 %v351, %v349
    %v436 = vpack.c.b16 %v354, %v352
    %v437 = vpack.c.b16 %v355, %v353
    %v438 = vpack.c.b16 %v358, %v356
    %v439 = vpack.c.b16 %v359, %v357
    %v440 = vpack.c.b16 %v362, %v360
    %v441 = vpack.c.b16 %v363, %v361
    %v442 = vpack.c.b16 %v366, %v364
    %v443 = vpack.c.b16 %v367, %v365
    %v444 = vpack.c.b16 %v370, %v368
    %v445 = vpack.c.b16 %v371, %v369
    %v446 = vpack.c.b16 %v374, %v372
    %v447 = vpack.c.b16 %v375, %v373
    %vm520 = vcmask 523264
    %v522 = vsel %vm520, %v155, 0
    %524 = vmatpush.bf16.msra.mxu0 %v390
    %525 = vmatpush.bf16.msra.mxu0 %v388
    %526 = vmatpush.bf16.msra.mxu0 %v386
    %527 = vmatpush.bf16.msra.mxu0 %v384
    %528 = vmatpush.bf16.msra.mxu0 %v382
    %529 = vmatpush.bf16.msra.mxu0 %v380
    %530 = vmatpush.bf16.msra.mxu0 %v378
    %531 = vmatpush.bf16.msra.mxu0 %v376
    %532 = vmatmul.bf16.gmra.mxu0 %v151
    %v533 = vpop.f32.mrf.mxu0
    %v534 = vadd.f32 0.0, %v533
    %v535 = vpop.f32.mrf.mxu0
    %v536 = vadd.f32 0.0, %v535
    %537 = vdwg.mxu0
    %538 = vmatpush.bf16.msra.mxu0 %v406
    %539 = vmatpush.bf16.msra.mxu0 %v404
    %540 = vmatpush.bf16.msra.mxu0 %v402
    %541 = vmatpush.bf16.msra.mxu0 %v400
    %542 = vmatpush.bf16.msra.mxu0 %v398
    %543 = vmatpush.bf16.msra.mxu0 %v396
    %544 = vmatpush.bf16.msra.mxu0 %v394
    %545 = vmatpush.bf16.msra.mxu0 %v392
    %546 = vmatmul.bf16.gmra.mxu0 %v152
    %v547 = vpop.f32.mrf.mxu0
    %v548 = vadd.f32 %v534, %v547
    %v549 = vpop.f32.mrf.mxu0
    %v550 = vadd.f32 %v536, %v549
    %551 = vdwg.mxu0
    %552 = vmatpush.bf16.msra.mxu0 %v422
    %553 = vmatpush.bf16.msra.mxu0 %v420
    %554 = vmatpush.bf16.msra.mxu0 %v418
    %555 = vmatpush.bf16.msra.mxu0 %v416
    %556 = vmatpush.bf16.msra.mxu0 %v414
    %557 = vmatpush.bf16.msra.mxu0 %v412
    %558 = vmatpush.bf16.msra.mxu0 %v410
    %559 = vmatpush.bf16.msra.mxu0 %v408
    %560 = vmatmul.bf16.gmra.mxu0 %v153
    %v561 = vpop.f32.mrf.mxu0
    %v562 = vadd.f32 %v548, %v561
    %v563 = vpop.f32.mrf.mxu0
    %v564 = vadd.f32 %v550, %v563
    %565 = vdwg.mxu0
    %566 = vmatpush.bf16.msra.mxu0 %v438
    %567 = vmatpush.bf16.msra.mxu0 %v436
    %568 = vmatpush.bf16.msra.mxu0 %v434
    %569 = vmatpush.bf16.msra.mxu0 %v432
    %570 = vmatpush.bf16.msra.mxu0 %v430
    %571 = vmatpush.bf16.msra.mxu0 %v428
    %572 = vmatpush.bf16.msra.mxu0 %v426
    %573 = vmatpush.bf16.msra.mxu0 %v424
    %574 = vmatmul.bf16.gmra.mxu0 %v154
    %v575 = vpop.f32.mrf.mxu0
    %v576 = vadd.f32 %v562, %v575
    %v577 = vpop.f32.mrf.mxu0
    %v578 = vadd.f32 %v564, %v577
    %579 = vdwg.mxu0
    %580 = vmatpush.bf16.msra.mxu0 0
    %581 = vmatpush.bf16.msra.mxu0 0
    %582 = vmatpush.bf16.msra.mxu0 0
    %583 = vmatpush.bf16.msra.mxu0 0
    %584 = vmatpush.bf16.msra.mxu0 %v446
    %585 = vmatpush.bf16.msra.mxu0 %v444
    %586 = vmatpush.bf16.msra.mxu0 %v442
    %587 = vmatpush.bf16.msra.mxu0 %v440
    %588 = vmatmul.bf16.gmra.mxu0 %v522
    %v589 = vpop.f32.mrf.mxu0
    %v590 = vadd.f32 %v576, %v589
    %v591 = vpop.f32.mrf.mxu0
    %v592 = vadd.f32 %v578, %v591
    %593 = vdwg.mxu0
    %594 = vmatpush.bf16.msra.mxu0 %v391
    %595 = vmatpush.bf16.msra.mxu0 %v389
    %596 = vmatpush.bf16.msra.mxu0 %v387
    %597 = vmatpush.bf16.msra.mxu0 %v385
    %598 = vmatpush.bf16.msra.mxu0 %v383
    %599 = vmatpush.bf16.msra.mxu0 %v381
    %600 = vmatpush.bf16.msra.mxu0 %v379
    %601 = vmatpush.bf16.msra.mxu0 %v377
    %602 = vmatmul.bf16.gmra.mxu0 %v151
    %v603 = vpop.f32.mrf.mxu0
    %v604 = vadd.f32 0.0, %v603
    %v605 = vpop.f32.mrf.mxu0
    %v606 = vadd.f32 0.0, %v605
    %607 = vdwg.mxu0
    %608 = vmatpush.bf16.msra.mxu0 %v407
    %609 = vmatpush.bf16.msra.mxu0 %v405
    %610 = vmatpush.bf16.msra.mxu0 %v403
    %611 = vmatpush.bf16.msra.mxu0 %v401
    %612 = vmatpush.bf16.msra.mxu0 %v399
    %613 = vmatpush.bf16.msra.mxu0 %v397
    %614 = vmatpush.bf16.msra.mxu0 %v395
    %615 = vmatpush.bf16.msra.mxu0 %v393
    %616 = vmatmul.bf16.gmra.mxu0 %v152
    %v617 = vpop.f32.mrf.mxu0
    %v618 = vadd.f32 %v604, %v617
    %v619 = vpop.f32.mrf.mxu0
    %v620 = vadd.f32 %v606, %v619
    %621 = vdwg.mxu0
    %622 = vmatpush.bf16.msra.mxu0 %v423
    %623 = vmatpush.bf16.msra.mxu0 %v421
    %624 = vmatpush.bf16.msra.mxu0 %v419
    %625 = vmatpush.bf16.msra.mxu0 %v417
    %626 = vmatpush.bf16.msra.mxu0 %v415
    %627 = vmatpush.bf16.msra.mxu0 %v413
    %628 = vmatpush.bf16.msra.mxu0 %v411
    %629 = vmatpush.bf16.msra.mxu0 %v409
    %630 = vmatmul.bf16.gmra.mxu0 %v153
    %v631 = vpop.f32.mrf.mxu0
    %v632 = vadd.f32 %v618, %v631
    %v633 = vpop.f32.mrf.mxu0
    %v634 = vadd.f32 %v620, %v633
    %635 = vdwg.mxu0
    %636 = vmatpush.bf16.msra.mxu0 %v439
    %637 = vmatpush.bf16.msra.mxu0 %v437
    %638 = vmatpush.bf16.msra.mxu0 %v435
    %639 = vmatpush.bf16.msra.mxu0 %v433
    %640 = vmatpush.bf16.msra.mxu0 %v431
    %641 = vmatpush.bf16.msra.mxu0 %v429
    %642 = vmatpush.bf16.msra.mxu0 %v427
    %643 = vmatpush.bf16.msra.mxu0 %v425
    %644 = vmatmul.bf16.gmra.mxu0 %v154
    %v645 = vpop.f32.mrf.mxu0
    %v646 = vadd.f32 %v632, %v645
    %v647 = vpop.f32.mrf.mxu0
    %v648 = vadd.f32 %v634, %v647
    %649 = vdwg.mxu0
    %650 = vmatpush.bf16.msra.mxu0 0
    %651 = vmatpush.bf16.msra.mxu0 0
    %652 = vmatpush.bf16.msra.mxu0 0
    %653 = vmatpush.bf16.msra.mxu0 0
    %654 = vmatpush.bf16.msra.mxu0 %v447
    %655 = vmatpush.bf16.msra.mxu0 %v445
    %656 = vmatpush.bf16.msra.mxu0 %v443
    %657 = vmatpush.bf16.msra.mxu0 %v441
    %658 = vmatmul.bf16.gmra.mxu0 %v522
    %v659 = vpop.f32.mrf.mxu0
    %v660 = vadd.f32 %v646, %v659
    %v661 = vpop.f32.mrf.mxu0
    %v662 = vadd.f32 %v648, %v661
    %663 = vdwg.mxu0
    %v664 = vadd.f32 %v53, %v590
    %v665 = vadd.f32 %v54, %v660
    %v666 = vadd.f32 %v55, %v592
    %v667 = vadd.f32 %v56, %v662
    %668 = vst [vmem:[#allocation2] sm:$0xff] %v664
    %669 = vst [vmem:[#allocation2 + $0x8] sm:$0xff] %v665
    %670 = vst [vmem:[#allocation2 + $0x10] sm:$0xff] %v666
    %671 = vst [vmem:[#allocation2 + $0x18] sm:$0xff] %v667
    // Predicated region
    $region22: #{tpu_custom_call.1} parent=1 // pred_check
      %p672 = pneg %p45
    $region23: #{tpu_custom_call.1} parent=1 // pred_check_branch
      %674 = sbr.rel (%p672) target = $region25
    $region24: #{tpu_custom_call.1} parent=1 // pred_region
      %v675 = vld [vmem:[#allocation2] sm:$0xff]
      %v676 = vld [vmem:[#allocation2 + $0x8] sm:$0xff]
      %v677 = vld [vmem:[#allocation2 + $0x10] sm:$0xff]
      %v678 = vld [vmem:[#allocation2 + $0x18] sm:$0xff]
      %v679 = vpack.c.bf16 %v676, %v675
      %v680 = vpack.c.bf16 %v678, %v677
      %681 = vst [vmem:[#allocation8] sm:$0xff] %v679
      %682 = vst [vmem:[#allocation8 + $0x8] sm:$0xff] %v680
    $region25: #{tpu_custom_call.1} parent=1 // pred_fallthru
      _
    // Predicated region
    $region26: #{tpu_custom_call.1} parent=1 // pred_check
      _
    $region27: #{tpu_custom_call.1} parent=1 // pred_check_branch
      %684 = sbr.rel (0) target = $region29
    $region28: #{tpu_custom_call.1} parent=1 // pred_region
      %686 = vsyncadd [#allocation5], 0
      %s687 = sshll.u32 [#allocation8], 4
      %s688 = int_to_ptr.vmem [resolvable:$true] %s687
      %s689 = sshll.u32 %s2, 4
      %s690 = int_to_ptr.hbm [resolvable:$true] %s689
      %695 = dma.vmem_to_hbm [thread:$0]  %s688, 256, %s690, [#allocation5], 128, 128, 8
    $region29: #{tpu_custom_call.1} parent=1 // pred_fallthru
      _
    // Predicated region
    $region30: #{tpu_custom_call.1} parent=1 // pred_check
      _
    $region31: #{tpu_custom_call.1} parent=1 // pred_check_branch
      %697 = sbr.rel (0) target = $region33
    $region32: #{tpu_custom_call.1} parent=1 // pred_region
      %699 = dma.done [#allocation5], 256
    $region33: #{tpu_custom_call.1} parent=1 // pred_fallthru
      _
    %700 = vsyncpa [#allocation4], 1
    %701 = vsyncpa [#allocation7], 1
    %702 = vsyncpa [#allocation5], 1

</llo_original>
